<compile_context>
chip_gen: v5e
topology: v5e:2x2
jax: 0.10.0
libtpu: 0.0.40
codegen_flags: <defaults>
</compile_context>

<pallas_src>
import jax
import jax.numpy as jnp
from jax.experimental import pallas as pl
from jax.experimental.pallas import tpu as pltpu

STATE_DIM = 32   # state_dim of the Linear layer


# ------------------------------ Pallas kernel ---------------------------------
def linear_kernel(x_ref, w_ref, b_ref, o_ref):
    # x_ref: (N, D), w_ref: (D, D), b_ref: (1, D) — whole arrays, VMEM-resident.
    # MXU matmul with f32 accumulation; bias add in f32 on the VPU; single cast.
    acc = jnp.dot(x_ref[...], w_ref[...], preferred_element_type=jnp.float32)
    o_ref[...] = (acc + b_ref[...].astype(jnp.float32)).astype(o_ref.dtype)


# ------------------------------ wrapper ----------------------------------------
def instruction_encoder_forward(instruction_state, w_t, b):
    """y = instruction_state @ w_t + b   (== PyTorch x @ W.T + b, W:(out,in))."""
    orig_shape = instruction_state.shape
    d = orig_shape[-1]
    x2d = instruction_state.reshape(-1, d)        # collapse leading dims, no cast
    n = x2d.shape[0]
    out_dtype = jnp.result_type(x2d.dtype, w_t.dtype)

    elem = lambda a: a.size * a.dtype.itemsize
    cost = pl.CostEstimate(
        flops=2 * n * d * d + n * d,              # matmul + bias add
        transcendentals=0,
        bytes_accessed=elem(x2d) + elem(w_t) + elem(b)
        + n * d * jnp.dtype(out_dtype).itemsize,
    )

    vmem_spec = pl.BlockSpec(memory_space=pltpu.MemorySpace.VMEM)
    out = pl.pallas_call(
        linear_kernel,
        out_shape=jax.ShapeDtypeStruct((n, d), out_dtype),
        in_specs=[vmem_spec, vmem_spec, vmem_spec],   # whole arrays, no grid,
        out_specs=vmem_spec,                          # no pipelining machinery
        cost_estimate=cost,
    )(x2d, w_t, b)
    return out.reshape(orig_shape)


def encode_for_loss(instruction_state, w_t, b):
    # Same linear projection as forward(); shares the identical fused kernel.
    return instruction_encoder_forward(instruction_state, w_t, b)


# ------------------------------ parameter init ---------------------------------
def init_params(key):
    # Mirrors nn.Linear default init: uniform(-1/sqrt(in), +1/sqrt(in)).
    kw, kb = jax.random.split(key)
    bound = 1.0 / (STATE_DIM ** 0.5)
    w_t = jax.random.uniform(kw, (STATE_DIM, STATE_DIM), jnp.float32,
                             minval=-bound, maxval=bound)   # stored as (in, out)
    b = jax.random.uniform(kb, (1, STATE_DIM), jnp.float32,
                           minval=-bound, maxval=bound)
    return w_t, b


# ------------------------------ pure-JAX reference ------------------------------
def _reference_forward(x, w_t, b):
    return x.astype(jnp.float32) @ w_t + b


# ---------------------------------- main ----------------------------------------
if __name__ == "__main__":
    key = jax.random.PRNGKey(0)
    kp, kx = jax.random.split(key)
    w_t, b = init_params(kp)

    B = 2
    instruction_state = jax.random.normal(kx, (B, STATE_DIM), dtype=jnp.float32)

    y = instruction_encoder_forward(instruction_state, w_t, b)
    y = jax.block_until_ready(y)

    y_ref = _reference_forward(instruction_state, w_t, b)
    assert y.shape == (B, STATE_DIM)
    assert jnp.allclose(y, y_ref, atol=1e-5, rtol=1e-5)

    # encode_for_loss path is the identical projection.
    y_loss = jax.block_until_ready(encode_for_loss(instruction_state, w_t, b))
    assert jnp.allclose(y_loss, y_ref, atol=1e-5, rtol=1e-5)

    print("KERNEL_OK")
</pallas_src>

<mosaic_0001>
module attributes {stable_mosaic.version = 11 : i64} {
  func.func @linear_kernel(%arg0: memref<2x32xf32, #tpu.memory_space<vmem>>, %arg1: memref<32x32xf32, #tpu.memory_space<vmem>>, %arg2: memref<1x32xf32, #tpu.memory_space<vmem>>, %arg3: memref<2x32xf32, #tpu.memory_space<vmem>>) attributes {dimension_semantics = [], scalar_prefetch = 0 : i64, scratch_operands = 0 : i64, tpu.core_type = #tpu.core_type<tc>} {
    %c0 = arith.constant 0 : index
    %c0_0 = arith.constant 0 : index
    %0 = vector.load %arg0[%c0, %c0_0] : memref<2x32xf32, #tpu.memory_space<vmem>>, vector<2x32xf32>
    %c0_1 = arith.constant 0 : index
    %c0_2 = arith.constant 0 : index
    %1 = vector.load %arg1[%c0_1, %c0_2] : memref<32x32xf32, #tpu.memory_space<vmem>>, vector<32x32xf32>
    %cst = arith.constant dense<0.000000e+00> : vector<2x32xf32>
    %2 = tpu.matmul %0, %1, %cst {dimension_numbers = #tpu.dot_dimension_numbers<[1], [0], [0], [1], [0, 0, 1, 1], [], []>} : vector<2x32xf32>, vector<32x32xf32>, vector<2x32xf32> -> vector<2x32xf32>
    %c0_3 = arith.constant 0 : index
    %c0_4 = arith.constant 0 : index
    %3 = vector.load %arg2[%c0_3, %c0_4] : memref<1x32xf32, #tpu.memory_space<vmem>>, vector<1x32xf32>
    %4 = vector.broadcast %3 : vector<1x32xf32> to vector<2x32xf32>
    %5 = arith.addf %2, %4 : vector<2x32xf32>
    %c0_5 = arith.constant 0 : index
    %c0_6 = arith.constant 0 : index
    %6 = vector.load %arg3[%c0_5, %c0_6] : memref<2x32xf32, #tpu.memory_space<vmem>>, vector<2x32xf32>
    tpu.vector_store %arg3[%c0_5, %c0_6], %5 {strides = array<i32>} : memref<2x32xf32, #tpu.memory_space<vmem>>, vector<2x32xf32>,
    return
  }
}

</mosaic_0001>

<llo_original>
// kernel: tpu_custom_call.1
$region0: #{tpu_custom_call.1}
  #allocation0 [shape = 'u32[]', space=smem, size = 0x4, offset = 0x4, fixed_abs, tag = 'smem constant byte address 0x4 - core index']
  #allocation1 [shape = 'u32[72,128]{1,0:T(1,128)}', space=vmem, size = 0x9000, scoped, tag = 'internal scratch']
  %s0 = inlined_call_operand.hbm [shape: f32[2,32], index: 0, kind: input, shape index: {}]
  %s1 = inlined_call_operand.hbm [shape: f32[32,32], index: 1, kind: input, shape index: {}]
  %s2 = inlined_call_operand.vmem [shape: f32[1,32], index: 2, kind: input, shape index: {}]
  %s3 = inlined_call_operand.hbm [shape: f32[2,32], index: 3, kind: output, shape index: {}]
  %s4 = sld [smem:[#allocation0]]
  $region30: #{tpu_custom_call.1} parent=0
    _
  %s6 = ssub.s32 1, %s4
  %s7 = scalar_select 0, %s6, %s4
  $region1: #{tpu_custom_call.1} parent=0
    #allocation2 [shape = 'u8[1024]{0}', space=vmem, size = 0x400, scoped, tag = 'input window, operand 0, single buffered']
    #allocation3 [shape = 's32[1]{0}', space=sflag, size = 0x4, scoped, tag = 'scoped memory for tpu_custom_call.1']
    #allocation4 [shape = 's32[1]{0}', space=sflag, size = 0x4, scoped, tag = 'scoped memory for tpu_custom_call.1']
    #allocation5 [shape = 'u8[16384]{0}', space=vmem, size = 0x4000, scoped, tag = 'input window, operand 1, single buffered']
    #allocation6 [shape = 's32[1]{0}', space=sflag, size = 0x4, scoped, tag = 'scoped memory for tpu_custom_call.1']
    #allocation7 [shape = 'u8[1024]{0}', space=vmem, size = 0x400, scoped, tag = 'output window, operand 0, single buffered']
    %8 = vsyncpa [#allocation3], 0
    %9 = vsyncpa [#allocation6], 0
    %10 = vsyncpa [#allocation4], 0
    // Predicated region
    $region2: #{tpu_custom_call.1} parent=1 // pred_check
      _
    $region3: #{tpu_custom_call.1} parent=1 // pred_check_branch
      %12 = sbr.rel (0) target = $region5
    $region4: #{tpu_custom_call.1} parent=1 // pred_region
      %14 = vsyncadd [#allocation3], 0
      %s16 = sshll.u32 %s0, 4
      %s17 = int_to_ptr.hbm [resolvable:$true] %s16
      %s18 = sshll.u32 [#allocation2], 4
      %s19 = int_to_ptr.vmem [resolvable:$true] %s18
      %21 = dma.hbm_to_vmem [thread:$0]  %s17, 32, %s19, [#allocation3]
    $region5: #{tpu_custom_call.1} parent=1 // pred_fallthru
      _
    // Predicated region
    $region6: #{tpu_custom_call.1} parent=1 // pred_check
      _
    $region7: #{tpu_custom_call.1} parent=1 // pred_check_branch
      %23 = sbr.rel (0) target = $region9
    $region8: #{tpu_custom_call.1} parent=1 // pred_region
      %25 = vsyncadd [#allocation6], 0
      %s26 = sshll.u32 %s1, 4
      %s27 = int_to_ptr.hbm [resolvable:$true] %s26
      %s28 = sshll.u32 [#allocation5], 4
      %s29 = int_to_ptr.vmem [resolvable:$true] %s28
      %34 = dma.hbm_to_vmem [thread:$0]  %s27, 512, %s29, [#allocation6], 128, 128, 8
    $region9: #{tpu_custom_call.1} parent=1 // pred_fallthru
      _
    // Predicated region
    $region10: #{tpu_custom_call.1} parent=1 // pred_check
      _
    $region11: #{tpu_custom_call.1} parent=1 // pred_check_branch
      %36 = sbr.rel (0) target = $region13
    $region12: #{tpu_custom_call.1} parent=1 // pred_region
      _
    $region13: #{tpu_custom_call.1} parent=1 // pred_fallthru
      _
    // Predicated region
    $region14: #{tpu_custom_call.1} parent=1 // pred_check
      _
    $region15: #{tpu_custom_call.1} parent=1 // pred_check_branch
      %38 = sbr.rel (0) target = $region17
    $region16: #{tpu_custom_call.1} parent=1 // pred_region
      %40 = dma.done [#allocation3], 32
    $region17: #{tpu_custom_call.1} parent=1 // pred_fallthru
      _
    // Predicated region
    $region18: #{tpu_custom_call.1} parent=1 // pred_check
      _
    $region19: #{tpu_custom_call.1} parent=1 // pred_check_branch
      %42 = sbr.rel (0) target = $region21
    $region20: #{tpu_custom_call.1} parent=1 // pred_region
      %44 = dma.done [#allocation6], 512
    $region21: #{tpu_custom_call.1} parent=1 // pred_fallthru
      _
    %v45 = vld [vmem:[#allocation2] sm:$0x3]
    %v46 = vld [vmem:[#allocation5] sm:$0xff]
    %v47 = vld [vmem:[#allocation5 + $0x8] sm:$0xff]
    %v48 = vld [vmem:[#allocation5 + $0x10] sm:$0xff]
    %v49 = vld [vmem:[#allocation5 + $0x18] sm:$0xff]
    %v50 = vld [vmem:[%s2] sm:$0x1]
    %v52 = vperm.slane %v50, 0
    %vm54 = vcmask 261120
    %v56 = vsel %vm54, %v45, 0
    %58 = vmatpush.msra.mxu0 0.0
    %59 = vmatpush.msra.mxu0 0.0
    %60 = vmatpush.msra.mxu0 0.0
    %61 = vmatpush.msra.mxu0 0.0
    %62 = vmatpush.msra.mxu0 0.0
    %63 = vmatpush.msra.mxu0 0.0
    %64 = vmatpush.msra.mxu0 0.0
    %65 = vmatpush.msra.mxu0 0.0
    %66 = vmatpush.msra.mxu0 0.0
    %67 = vmatpush.msra.mxu0 0.0
    %68 = vmatpush.msra.mxu0 0.0
    %69 = vmatpush.msra.mxu0 0.0
    %70 = vmatpush.msra.mxu0 %v49
    %71 = vmatpush.msra.mxu0 %v48
    %72 = vmatpush.msra.mxu0 %v47
    %73 = vmatpush.msra.mxu0 %v46
    %74 = vmatmul.f32.gmra.mxu0 %v56
    %v75 = vpop.f32.mrf.mxu0
    %v76 = vadd.f32 %v52, %v75
    %77 = vdwg.mxu0
    %vm78 = vcmask 254976
    %79 = vst.msk [vmem:[#allocation7] sm:$0x3] %vm78, %v76
    // Predicated region
    $region22: #{tpu_custom_call.1} parent=1 // pred_check
      _
    $region23: #{tpu_custom_call.1} parent=1 // pred_check_branch
      %81 = sbr.rel (0) target = $region25
    $region24: #{tpu_custom_call.1} parent=1 // pred_region
      %83 = vsyncadd [#allocation4], 0
      %s85 = sshll.u32 [#allocation7], 4
      %s86 = int_to_ptr.vmem [resolvable:$true] %s85
      %s87 = sshll.u32 %s3, 4
      %s88 = int_to_ptr.hbm [resolvable:$true] %s87
      %90 = dma.vmem_to_hbm [thread:$0]  %s86, 32, %s88, [#allocation4]
    $region25: #{tpu_custom_call.1} parent=1 // pred_fallthru
      _
    // Predicated region
    $region26: #{tpu_custom_call.1} parent=1 // pred_check
      _
    $region27: #{tpu_custom_call.1} parent=1 // pred_check_branch
      %92 = sbr.rel (0) target = $region29
    $region28: #{tpu_custom_call.1} parent=1 // pred_region
      %94 = dma.done [#allocation4], 32
    $region29: #{tpu_custom_call.1} parent=1 // pred_fallthru
      _
    %95 = vsyncpa [#allocation3], 1
    %96 = vsyncpa [#allocation6], 1
    %97 = vsyncpa [#allocation4], 1

</llo_original>
